<compile_context>
chip_gen: v7x
topology: tpu7x:2x2x1
jax: 0.10.0
libtpu: 0.0.40
codegen_flags: <defaults>
</compile_context>

<pallas_src>
import functools

import jax
import jax.numpy as jnp
from jax.experimental import pallas as pl
from jax.experimental.pallas import tpu as pltpu


# ----------------------------- config (conf.*) -----------------------------
class conf:
    num_users = 64
    num_items = 64
    gmf_embed_dim = 32
    mlp_embed_dim = 32
    # mlp_dim_list[0] must equal 2*mlp_embed_dim; last entry feeds final_linear
    mlp_dim_list = [64, 32, 32]


def _round_up(x, m):
    return ((x + m - 1) // m) * m


# ------------------------------ Pallas kernel -------------------------------
def ncf_kernel(uil_ref, tab_ref, out_ref, *, nu, r):
    # uil_ref : (1, 3, TB) int32  -- rows: user idx, item idx, label (f32 bits)
    # tab_ref : (2R, NCpad) f32   -- block-diag folded gather table (resident)
    # out_ref : (1, 2, TB) f32    -- rows: prediction, squared error
    blk = uil_ref[0]                                    # (3, TB) int32
    u_idx = blk[0:1, :]                                 # (1, TB)
    i_idx = blk[1:2, :]                                 # (1, TB)
    label = pltpu.bitcast(blk[2:3, :], jnp.float32)     # (1, TB)

    nc = tab_ref.shape[1]
    tb = blk.shape[1]

    # Combined user+item one-hot: rows [0, nu) mark the user, rows [nu, ...) the
    # item.  One compare-pair per element; batch stays on the lane axis.
    row = jax.lax.broadcasted_iota(jnp.int32, (nc, tb), 0)
    oh = jnp.logical_or(row == u_idx, row == (i_idx + nu)).astype(jnp.float32)

    # Single gather matmul: (2R, nc) @ (nc, TB) -> (2R, TB).
    e = jnp.dot(tab_ref[...], oh, preferred_element_type=jnp.float32)
    eu = e[:r, :]                                       # user-side columns
    ei = e[r:, :]                                       # item-side columns

    # pred = (gmf_u * v_g) . gmf_i + su[u] + si[i] + bf   (all folded in e rows)
    pred = jnp.sum(eu * ei, axis=0, keepdims=True)      # (1, TB)
    diff = pred - label
    out_ref[0] = jnp.concatenate([pred, diff * diff], axis=0)   # (2, TB)


# --------------------------------- wrapper ----------------------------------
def ncf_forward(params, user, item, label, *, tile_b=2048):
    """Forward pass: fully-folded, lane-dense, single-matmul Pallas kernel."""
    B = user.shape[0]
    Dg = conf.gmf_embed_dim
    Dm = conf.mlp_embed_dim
    NU, NI = conf.num_users, conf.num_items

    # ---- offline fold of the whole dense head (tiny, done once per call) ----
    # pred = gmf . wf[:Dg] + cat(mlp_u, mlp_i) @ (W1 @ ... @ Wn) @ wf[Dg:] + bf
    w_mlp = functools.reduce(jnp.dot, params["mlp_ws"])     # (2*Dm, D_last)
    wf = params["wf"]                                       # (Dg + D_last, 1)
    v_g = wf[:Dg, 0]                                        # (Dg,)
    v_ml = jnp.dot(w_mlp, wf[Dg:, :])[:, 0]                 # (2*Dm,)
    su = jnp.dot(params["mlp_user_w"], v_ml[:Dm])           # (NU,) per-user MLP term
    si = jnp.dot(params["mlp_item_w"], v_ml[Dm:])           # (NI,) per-item MLP term
    bf = params["bf"].reshape(())                           # scalar bias

    # Per-side tables: rows [0,Dg) = (scaled) gmf embedding, then 3 aux rows
    # whose elementwise product (user-side * item-side) yields su[u]+si[i]+bf.
    R = _round_up(Dg + 3, 8)                                # sublane-aligned split
    NC = NU + NI
    NC_pad = _round_up(NC, 128)

    Tu = jnp.zeros((R, NU), jnp.float32)
    Tu = Tu.at[:Dg, :].set((params["gmf_user_w"] * v_g[None, :]).T)
    Tu = Tu.at[Dg, :].set(su)
    Tu = Tu.at[Dg + 1, :].set(1.0)
    Tu = Tu.at[Dg + 2, :].set(bf)

    Ti = jnp.zeros((R, NI), jnp.float32)
    Ti = Ti.at[:Dg, :].set(params["gmf_item_w"].T)
    Ti = Ti.at[Dg, :].set(1.0)
    Ti = Ti.at[Dg + 1, :].set(si)
    Ti = Ti.at[Dg + 2, :].set(1.0)

    tab = jnp.zeros((2 * R, NC_pad), jnp.float32)           # block-diagonal
    tab = tab.at[:R, :NU].set(Tu)
    tab = tab.at[R:, NU:NU + NI].set(Ti)

    # ---- lane-dense batch tiling (batch on the lane axis) ----
    B128 = _round_up(max(B, 1), 128)
    TB = min(_round_up(tile_b, 128), B128)
    if B128 >= 2 * 128:          # v7x: guarantee >= 2 "parallel" grid tiles
        TB = min(TB, _round_up(B128 // 2, 128))
    B_pad = _round_up(B, TB)
    num_tiles = B_pad // TB
    pad = B_pad - B

    u32 = jnp.pad(user.astype(jnp.int32), (0, pad))
    i32 = jnp.pad(item.astype(jnp.int32), (0, pad))
    lbits = jax.lax.bitcast_convert_type(
        jnp.pad(label.astype(jnp.float32), (0, pad)), jnp.int32)
    packed_in = jnp.stack([u32, i32, lbits], axis=0)                 # (3, B_pad)
    packed_in = packed_in.reshape(3, num_tiles, TB).transpose(1, 0, 2)

    kernel = functools.partial(ncf_kernel, nu=NU, r=R)

    out = pl.pallas_call(
        kernel,
        out_shape=jax.ShapeDtypeStruct((num_tiles, 2, TB), jnp.float32),
        grid=(num_tiles,),
        in_specs=[
            pl.BlockSpec((1, 3, TB), lambda t: (t, 0, 0)),           # packed u/i/label
            pl.BlockSpec((2 * R, NC_pad), lambda t: (0, 0)),         # resident table
        ],
        out_specs=pl.BlockSpec((1, 2, TB), lambda t: (t, 0, 0)),     # packed pred/sq
        compiler_params=pltpu.CompilerParams(
            dimension_semantics=("parallel",)),
    )(packed_in, tab)

    flat = out.transpose(1, 0, 2).reshape(2, B_pad)
    pred = flat[0, :B]
    mse_loss = flat[1, :B]                     # MSELoss(reduction='none')
    obj_loss = jnp.sum(mse_loss)               # MSELoss(reduction='sum')
    return pred, obj_loss, mse_loss


# ----------------------- pure-JAX layer-by-layer reference ------------------
def ncf_reference(params, user, item, label):
    gmf_u = params["gmf_user_w"][user]
    gmf_i = params["gmf_item_w"][item]
    mlp_u = params["mlp_user_w"][user]
    mlp_i = params["mlp_item_w"][item]
    gmf = gmf_u * gmf_i
    mlp = jnp.concatenate([mlp_u, mlp_i], axis=1)
    for w in params["mlp_ws"]:
        mlp = jnp.dot(mlp, w)
    final = jnp.concatenate([gmf, mlp], axis=1)
    pred = jnp.dot(final, params["wf"])[:, 0] + params["bf"].reshape(())
    mse = (pred - label.astype(jnp.float32)) ** 2
    return pred, jnp.sum(mse), mse


# --------------------------- deterministic params ---------------------------
def init_params(key):
    Dg, Dm = conf.gmf_embed_dim, conf.mlp_embed_dim
    dims = conf.mlp_dim_list
    n_lin = len(dims) - 1
    ks = jax.random.split(key, 4 + n_lin + 2)

    def xavier_uniform(k, fan_in, fan_out):
        bound = (6.0 / (fan_in + fan_out)) ** 0.5
        return jax.random.uniform(k, (fan_in, fan_out), jnp.float32, -bound, bound)

    fin = Dg + dims[-1]                 # final_linear input dim
    fbound = 1.0 / (fin ** 0.5)         # default torch nn.Linear init bound

    params = {
        # embeddings: 0.1 * N(0,1), as in reinit()
        "gmf_user_w": 0.1 * jax.random.normal(ks[0], (conf.num_users, Dg), jnp.float32),
        "gmf_item_w": 0.1 * jax.random.normal(ks[1], (conf.num_items, Dg), jnp.float32),
        "mlp_user_w": 0.1 * jax.random.normal(ks[2], (conf.num_users, Dm), jnp.float32),
        "mlp_item_w": 0.1 * jax.random.normal(ks[3], (conf.num_items, Dm), jnp.float32),
        # bias-free MLP linears (xavier uniform), stored as (in, out)
        "mlp_ws": [xavier_uniform(ks[4 + i], dims[i], dims[i + 1]) for i in range(n_lin)],
        # final linear (default torch init), stored as (in, out) + bias
        "wf": jax.random.uniform(ks[4 + n_lin], (fin, 1), jnp.float32, -fbound, fbound),
        "bf": jax.random.uniform(ks[5 + n_lin], (1, 1), jnp.float32, -fbound, fbound),
    }
    return params


if __name__ == "__main__":
    key = jax.random.PRNGKey(0)
    pkey, ukey, ikey, lkey = jax.random.split(key, 4)

    params = init_params(pkey)

    B = 8
    user = jax.random.randint(ukey, (B,), 0, conf.num_users, dtype=jnp.int32)
    item = jax.random.randint(ikey, (B,), 0, conf.num_items, dtype=jnp.int32)
    label = jax.random.uniform(lkey, (B,), jnp.float32, 1.0, 5.0)

    pred, obj_loss, mse_loss = jax.jit(ncf_forward)(params, user, item, label)
    jax.block_until_ready((pred, obj_loss, mse_loss))

    ref_pred, ref_obj, ref_mse = ncf_reference(params, user, item, label)

    assert pred.shape == (B,) and mse_loss.shape == (B,) and obj_loss.shape == ()
    assert bool(jnp.isfinite(pred).all()) and bool(jnp.isfinite(mse_loss).all())
    assert bool(jnp.allclose(pred, ref_pred, rtol=1e-4, atol=1e-5))
    assert bool(jnp.allclose(mse_loss, ref_mse, rtol=1e-4, atol=1e-5))
    assert bool(jnp.allclose(obj_loss, ref_obj, rtol=1e-4, atol=1e-5))
    print("KERNEL_OK")
</pallas_src>

<mosaic_0001>
module attributes {stable_mosaic.version = 11 : i64} {
  func.func @ncf_kernel(%arg0: i32, %arg1: memref<1x3x128xi32, #tpu.memory_space<vmem>>, %arg2: memref<80x128xf32, #tpu.memory_space<vmem>>, %arg3: memref<1x2x128xf32, #tpu.memory_space<vmem>>) attributes {dimension_semantics = [#tpu.dimension_semantics<parallel>], iteration_bounds = array<i64: 1>, scalar_prefetch = 0 : i64, scratch_operands = 0 : i64, tpu.core_type = #tpu.core_type<tc>, window_params = [{transform_indices = @transform_0, window_bounds = array<i64: 1, 3, 128>}, {pipeline_mode = #tpu.pipeline_mode<synchronous>, transform_indices = @transform_1, window_bounds = array<i64: 80, 128>}, {transform_indices = @transform_2, window_bounds = array<i64: 1, 2, 128>}]} {
    %c0 = arith.constant 0 : index
    %c0_0 = arith.constant 0 : index
    %c0_1 = arith.constant 0 : index
    %0 = vector.load %arg1[%c0, %c0_0, %c0_1] : memref<1x3x128xi32, #tpu.memory_space<vmem>>, vector<1x3x128xi32>
    %1 = vector.shape_cast %0 : vector<1x3x128xi32> to vector<3x128xi32>
    %2 = vector.extract_strided_slice %1 {offsets = [0, 0], sizes = [1, 128], strides = [1, 1]} : vector<3x128xi32> to vector<1x128xi32>
    %3 = vector.extract_strided_slice %1 {offsets = [1, 0], sizes = [1, 128], strides = [1, 1]} : vector<3x128xi32> to vector<1x128xi32>
    %4 = vector.extract_strided_slice %1 {offsets = [2, 0], sizes = [1, 128], strides = [1, 1]} : vector<3x128xi32> to vector<1x128xi32>
    %5 = tpu.bitcast %4 : vector<1x128xi32> -> vector<1x128xf32>
    %6 = tpu.iota {dimensions = array<i32: 0>} : vector<128x128xi32>
    %7 = vector.broadcast %2 : vector<1x128xi32> to vector<128x128xi32>
    %8 = arith.cmpi eq, %6, %7 : vector<128x128xi32>
    %c64_i32 = arith.constant 64 : i32
    %9 = vector.broadcast %c64_i32 : i32 to vector<1x128xi32>
    %10 = arith.addi %3, %9 : vector<1x128xi32>
    %11 = vector.broadcast %10 : vector<1x128xi32> to vector<128x128xi32>
    %12 = arith.cmpi eq, %6, %11 : vector<128x128xi32>
    %13 = arith.ori %8, %12 : vector<128x128xi1>
    %14 = arith.extui %13 : vector<128x128xi1> to vector<128x128xi32>
    %15 = arith.sitofp %14 : vector<128x128xi32> to vector<128x128xf32>
    %c0_2 = arith.constant 0 : index
    %c0_3 = arith.constant 0 : index
    %16 = vector.load %arg2[%c0_2, %c0_3] : memref<80x128xf32, #tpu.memory_space<vmem>>, vector<80x128xf32>
    %cst = arith.constant dense<0.000000e+00> : vector<80x128xf32>
    %17 = tpu.matmul %16, %15, %cst {dimension_numbers = #tpu.dot_dimension_numbers<[1], [0], [0], [1], [0, 0, 1, 1], [], []>} : vector<80x128xf32>, vector<128x128xf32>, vector<80x128xf32> -> vector<80x128xf32>
    %18 = vector.extract_strided_slice %17 {offsets = [0, 0], sizes = [40, 128], strides = [1, 1]} : vector<80x128xf32> to vector<40x128xf32>
    %19 = vector.extract_strided_slice %17 {offsets = [40, 0], sizes = [40, 128], strides = [1, 1]} : vector<80x128xf32> to vector<40x128xf32>
    %20 = arith.mulf %18, %19 : vector<40x128xf32>
    %cst_4 = arith.constant dense<0.000000e+00> : vector<128xf32>
    %21 = vector.multi_reduction <add>, %20, %cst_4 [0] : vector<40x128xf32> to vector<128xf32>
    %22 = vector.shape_cast %21 : vector<128xf32> to vector<1x128xf32>
    %23 = arith.subf %22, %5 : vector<1x128xf32>
    %24 = arith.mulf %23, %23 : vector<1x128xf32>
    %25 = tpu.concatenate %22, %24 in 0 : vector<1x128xf32>, vector<1x128xf32> -> vector<2x128xf32>
    %c0_5 = arith.constant 0 : index
    %c0_6 = arith.constant 0 : index
    %c0_7 = arith.constant 0 : index
    %26 = vector.load %arg3[%c0_5, %c0_6, %c0_7] : memref<1x2x128xf32, #tpu.memory_space<vmem>>, vector<1x2x128xf32>
    %27 = vector.shape_cast %26 : vector<1x2x128xf32> to vector<2x128xf32>
    %28 = vector.shape_cast %25 : vector<2x128xf32> to vector<1x2x128xf32>
    tpu.vector_store %arg3[%c0_5, %c0_6, %c0_7], %28 {strides = array<i32>} : memref<1x2x128xf32, #tpu.memory_space<vmem>>, vector<1x2x128xf32>,
    return
  }
  func.func @transform_0(%arg0: i32) -> (i32, i32, i32) {
    %c0_i32 = arith.constant 0 : i32
    %c0_i32_0 = arith.constant 0 : i32
    %c0_i32_1 = arith.constant 0 : i32
    return %arg0, %c0_i32, %c0_i32_0 : i32, i32, i32
  }
  func.func @transform_1(%arg0: i32) -> (i32, i32) {
    %c0_i32 = arith.constant 0 : i32
    %c0_i32_0 = arith.constant 0 : i32
    %c0_i32_1 = arith.constant 0 : i32
    return %c0_i32, %c0_i32_0 : i32, i32
  }
  func.func @transform_2(%arg0: i32) -> (i32, i32, i32) {
    %c0_i32 = arith.constant 0 : i32
    %c0_i32_0 = arith.constant 0 : i32
    %c0_i32_1 = arith.constant 0 : i32
    return %arg0, %c0_i32, %c0_i32_0 : i32, i32, i32
  }
}

</mosaic_0001>

<llo_original>
// kernel: ncf_forward.1
$region0: #{ncf_forward.1}
  #allocation0 [shape = 'u32[]', space=smem, size = 0x4, offset = 0x4, fixed_abs, tag = 'smem constant byte address 0x4 - core index']
  #allocation1 [shape = 'u32[144,128]{1,0:T(1,128)}', space=vmem, size = 0x12000, scoped, tag = 'internal scratch']
  %s0 = inlined_call_operand.vmem [shape: s32[1,3,128], index: 0, kind: input, shape index: {}]
  %s1 = inlined_call_operand.vmem [shape: f32[80,128], index: 1, kind: input, shape index: {}]
  %s2 = inlined_call_operand.vmem [shape: f32[1,2,128], index: 2, kind: output, shape index: {}]
  %s3 = sld [smem:[#allocation0]]
  $region18: #{ncf_forward.1} parent=0
    _
  %s5 = ssub.s32 1, %s3
  %s6 = scalar_select 0, %s5, %s3
  // Predicated region
  $region2: #{ncf_forward.1} parent=0 // pred_check
    _
  $region3: #{ncf_forward.1} parent=0 // pred_check_branch
    %8 = sbr.rel (0) target = $region5
  $region4: #{ncf_forward.1} parent=0 // pred_region
    _
  $region5: #{ncf_forward.1} parent=0 // pred_fallthru
    _
  // Predicated region
  $region6: #{ncf_forward.1} parent=0 // pred_check
    _
  $region7: #{ncf_forward.1} parent=0 // pred_check_branch
    %10 = sbr.rel (0) target = $region9
  $region8: #{ncf_forward.1} parent=0 // pred_region
    _
  $region9: #{ncf_forward.1} parent=0 // pred_fallthru
    _
  %v11 = vld [vmem:[%s0] sm:$0x7]
  %v13 = vlaneseq
  %v14 = vshrl.u32 %v13, 7
  %v15 = vadd.s32 %v14, 8
  %v16 = vadd.s32 %v14, 16
  %v17 = vadd.s32 %v14, 24
  %v18 = vadd.s32 %v14, 32
  %v19 = vadd.s32 %v14, 40
  %v20 = vadd.s32 %v14, 48
  %v21 = vadd.s32 %v14, 56
  %v22 = vadd.s32 %v14, 64
  %v23 = vadd.s32 %v14, 72
  %v24 = vadd.s32 %v14, 80
  %v25 = vadd.s32 %v14, 88
  %v26 = vadd.s32 %v14, 96
  %v27 = vadd.s32 %v14, 104
  %v28 = vadd.s32 %v14, 112
  %v29 = vadd.s32 %v14, 120
  %v30 = vlaneseq
  %v31 = vshrl.u32 %v30, 7
  %v32 = vsub.s32 0, %v31
  %v33 = vrot.slane %v11, %v32
  %vm34 = vcmp.eq.s32.totalorder %v14, %v33
  %vm35 = vcmp.eq.s32.totalorder %v15, %v33
  %vm36 = vcmp.eq.s32.totalorder %v16, %v33
  %vm37 = vcmp.eq.s32.totalorder %v17, %v33
  %vm38 = vcmp.eq.s32.totalorder %v18, %v33
  %vm39 = vcmp.eq.s32.totalorder %v19, %v33
  %vm40 = vcmp.eq.s32.totalorder %v20, %v33
  %vm41 = vcmp.eq.s32.totalorder %v21, %v33
  %vm42 = vcmp.eq.s32.totalorder %v22, %v33
  %vm43 = vcmp.eq.s32.totalorder %v23, %v33
  %vm44 = vcmp.eq.s32.totalorder %v24, %v33
  %vm45 = vcmp.eq.s32.totalorder %v25, %v33
  %vm46 = vcmp.eq.s32.totalorder %v26, %v33
  %vm47 = vcmp.eq.s32.totalorder %v27, %v33
  %vm48 = vcmp.eq.s32.totalorder %v28, %v33
  %vm49 = vcmp.eq.s32.totalorder %v29, %v33
  %v50 = vadd.s32 %v11, 64
  %v51 = vlaneseq
  %v52 = vshrl.u32 %v51, 7
  %v53 = vsub.s32 1, %v52
  %v54 = vrot.slane %v50, %v53
  %vm55 = vcmp.eq.s32.totalorder %v14, %v54
  %vm56 = vcmp.eq.s32.totalorder %v15, %v54
  %vm57 = vcmp.eq.s32.totalorder %v16, %v54
  %vm58 = vcmp.eq.s32.totalorder %v17, %v54
  %vm59 = vcmp.eq.s32.totalorder %v18, %v54
  %vm60 = vcmp.eq.s32.totalorder %v19, %v54
  %vm61 = vcmp.eq.s32.totalorder %v20, %v54
  %vm62 = vcmp.eq.s32.totalorder %v21, %v54
  %vm63 = vcmp.eq.s32.totalorder %v22, %v54
  %vm64 = vcmp.eq.s32.totalorder %v23, %v54
  %vm65 = vcmp.eq.s32.totalorder %v24, %v54
  %vm66 = vcmp.eq.s32.totalorder %v25, %v54
  %vm67 = vcmp.eq.s32.totalorder %v26, %v54
  %vm68 = vcmp.eq.s32.totalorder %v27, %v54
  %vm69 = vcmp.eq.s32.totalorder %v28, %v54
  %vm70 = vcmp.eq.s32.totalorder %v29, %v54
  %vm71 = vmor %vm34, %vm55
  %vm72 = vmor %vm35, %vm56
  %vm73 = vmor %vm36, %vm57
  %vm74 = vmor %vm37, %vm58
  %vm75 = vmor %vm38, %vm59
  %vm76 = vmor %vm39, %vm60
  %vm77 = vmor %vm40, %vm61
  %vm78 = vmor %vm41, %vm62
  %vm79 = vmor %vm42, %vm63
  %vm80 = vmor %vm43, %vm64
  %vm81 = vmor %vm44, %vm65
  %vm82 = vmor %vm45, %vm66
  %vm83 = vmor %vm46, %vm67
  %vm84 = vmor %vm47, %vm68
  %vm85 = vmor %vm48, %vm69
  %vm86 = vmor %vm49, %vm70
  %v87 = vsel %vm71, 1, 0
  %v88 = vsel %vm72, 1, 0
  %v89 = vsel %vm73, 1, 0
  %v90 = vsel %vm74, 1, 0
  %v91 = vsel %vm75, 1, 0
  %v92 = vsel %vm76, 1, 0
  %v93 = vsel %vm77, 1, 0
  %v94 = vsel %vm78, 1, 0
  %v95 = vsel %vm79, 1, 0
  %v96 = vsel %vm80, 1, 0
  %v97 = vsel %vm81, 1, 0
  %v98 = vsel %vm82, 1, 0
  %v99 = vsel %vm83, 1, 0
  %v100 = vsel %vm84, 1, 0
  %v101 = vsel %vm85, 1, 0
  %v102 = vsel %vm86, 1, 0
  %v103 = vcvt.s32.f32 %v87
  %v104 = vcvt.s32.f32 %v88
  %v105 = vcvt.s32.f32 %v89
  %v106 = vcvt.s32.f32 %v90
  %v107 = vcvt.s32.f32 %v91
  %v108 = vcvt.s32.f32 %v92
  %v109 = vcvt.s32.f32 %v93
  %v110 = vcvt.s32.f32 %v94
  %v111 = vcvt.s32.f32 %v95
  %v112 = vcvt.s32.f32 %v96
  %v113 = vcvt.s32.f32 %v97
  %v114 = vcvt.s32.f32 %v98
  %v115 = vcvt.s32.f32 %v99
  %v116 = vcvt.s32.f32 %v100
  %v117 = vcvt.s32.f32 %v101
  %v118 = vcvt.s32.f32 %v102
  %v119 = vld [vmem:[%s1] sm:$0xff]
  %v120 = vld [vmem:[%s1 + $0x8] sm:$0xff]
  %v121 = vld [vmem:[%s1 + $0x10] sm:$0xff]
  %v122 = vld [vmem:[%s1 + $0x18] sm:$0xff]
  %v123 = vld [vmem:[%s1 + $0x20] sm:$0xff]
  %v124 = vld [vmem:[%s1 + $0x28] sm:$0xff]
  %v125 = vld [vmem:[%s1 + $0x30] sm:$0xff]
  %v126 = vld [vmem:[%s1 + $0x38] sm:$0xff]
  %v127 = vld [vmem:[%s1 + $0x40] sm:$0xff]
  %v128 = vld [vmem:[%s1 + $0x48] sm:$0xff]
  %129 = vmatprep.subr.mxu0 0.0
  %130 = vmatpush1.msra.mxu0 %v103
  %131 = vmatprep.subr.mxu0 0.0
  %132 = vmatpush1.msra.mxu0 %v104
  %133 = vmatprep.subr.mxu0 0.0
  %134 = vmatpush1.msra.mxu0 %v105
  %135 = vmatprep.subr.mxu0 0.0
  %136 = vmatpush1.msra.mxu0 %v106
  %137 = vmatprep.subr.mxu0 0.0
  %138 = vmatpush1.msra.mxu0 %v107
  %139 = vmatprep.subr.mxu0 0.0
  %140 = vmatpush1.msra.mxu0 %v108
  %141 = vmatprep.subr.mxu0 0.0
  %142 = vmatpush1.msra.mxu0 %v109
  %143 = vmatprep.subr.mxu0 0.0
  %144 = vmatpush1.msra.mxu0 %v110
  %145 = vmatprep.subr.mxu0 0.0
  %146 = vmatpush1.msra.mxu0 %v111
  %147 = vmatprep.subr.mxu0 0.0
  %148 = vmatpush1.msra.mxu0 %v112
  %149 = vmatprep.subr.mxu0 0.0
  %150 = vmatpush1.msra.mxu0 %v113
  %151 = vmatprep.subr.mxu0 0.0
  %152 = vmatpush1.msra.mxu0 %v114
  %153 = vmatprep.subr.mxu0 0.0
  %154 = vmatpush1.msra.mxu0 %v115
  %155 = vmatprep.subr.mxu0 0.0
  %156 = vmatpush1.msra.mxu0 %v116
  %157 = vmatprep.subr.mxu0 0.0
  %158 = vmatpush1.msra.mxu0 %v117
  %159 = vmatprep.subr.mxu0 0.0
  %160 = vmatpush1.msra.mxu0 %v118
  %161 = vmatprep.subr.mxu0 0.0
  %162 = vmatpush1.msra.mxu0 0.0
  %163 = vmatprep.subr.mxu0 0.0
  %164 = vmatpush1.msra.mxu0 0.0
  %165 = vmatprep.subr.mxu0 0.0
  %166 = vmatpush1.msra.mxu0 0.0
  %167 = vmatprep.subr.mxu0 0.0
  %168 = vmatpush1.msra.mxu0 0.0
  %169 = vmatprep.subr.mxu0 0.0
  %170 = vmatpush1.msra.mxu0 0.0
  %171 = vmatprep.subr.mxu0 0.0
  %172 = vmatpush1.msra.mxu0 0.0
  %173 = vmatprep.subr.mxu0 0.0
  %174 = vmatpush1.msra.mxu0 0.0
  %175 = vmatprep.subr.mxu0 0.0
  %176 = vmatpush1.msra.mxu0 0.0
  %177 = vmatprep.subr.mxu0 0.0
  %178 = vmatpush1.msra.mxu0 0.0
  %179 = vmatprep.subr.mxu0 0.0
  %180 = vmatpush1.msra.mxu0 0.0
  %181 = vmatprep.subr.mxu0 0.0
  %182 = vmatpush1.msra.mxu0 0.0
  %183 = vmatprep.subr.mxu0 0.0
  %184 = vmatpush1.msra.mxu0 0.0
  %185 = vmatprep.subr.mxu0 0.0
  %186 = vmatpush1.msra.mxu0 0.0
  %187 = vmatprep.subr.mxu0 0.0
  %188 = vmatpush1.msra.mxu0 0.0
  %189 = vmatprep.subr.mxu0 0.0
  %190 = vmatpush1.msra.mxu0 0.0
  %191 = vmatprep.subr.mxu0 0.0
  %192 = vmatpush1.msra.mxu0 0.0
  %193 = vmatprep.mubr.f32.mxu0 0.0
  %194 = vmatmul.mubr.f32.gmra.mrb[0].mxu0 %v119
  %v195 = vpop.f32.mrb[0].mxu0
  %v196 = vadd.f32 0.0, %v195
  %v197 = vpop.f32.mrb[0].mxu0
  %198 = vmatprep.mubr.f32.mxu0 0.0
  %199 = vmatmul.mubr.f32.gmra.mrb[0].mxu0 %v120
  %v200 = vpop.f32.mrb[0].mxu0
  %v201 = vadd.f32 0.0, %v200
  %v202 = vpop.f32.mrb[0].mxu0
  %203 = vmatprep.mubr.f32.mxu0 0.0
  %204 = vmatmul.mubr.f32.gmra.mrb[0].mxu0 %v121
  %v205 = vpop.f32.mrb[0].mxu0
  %v206 = vadd.f32 0.0, %v205
  %v207 = vpop.f32.mrb[0].mxu0
  %208 = vmatprep.mubr.f32.mxu0 0.0
  %209 = vmatmul.mubr.f32.gmra.mrb[0].mxu0 %v122
  %v210 = vpop.f32.mrb[0].mxu0
  %v211 = vadd.f32 0.0, %v210
  %v212 = vpop.f32.mrb[0].mxu0
  %213 = vmatprep.mubr.f32.mxu0 0.0
  %214 = vmatmul.mubr.f32.gmra.mrb[0].mxu0 %v123
  %v215 = vpop.f32.mrb[0].mxu0
  %v216 = vadd.f32 0.0, %v215
  %v217 = vpop.f32.mrb[0].mxu0
  %218 = vmatprep.mubr.f32.mxu0 0.0
  %219 = vmatmul.mubr.f32.gmra.mrb[0].mxu0 %v124
  %v220 = vpop.f32.mrb[0].mxu0
  %v221 = vadd.f32 0.0, %v220
  %v222 = vpop.f32.mrb[0].mxu0
  %223 = vmatprep.mubr.f32.mxu0 0.0
  %224 = vmatmul.mubr.f32.gmra.mrb[0].mxu0 %v125
  %v225 = vpop.f32.mrb[0].mxu0
  %v226 = vadd.f32 0.0, %v225
  %v227 = vpop.f32.mrb[0].mxu0
  %228 = vmatprep.mubr.f32.mxu0 0.0
  %229 = vmatmul.mubr.f32.gmra.mrb[0].mxu0 %v126
  %v230 = vpop.f32.mrb[0].mxu0
  %v231 = vadd.f32 0.0, %v230
  %v232 = vpop.f32.mrb[0].mxu0
  %233 = vmatprep.mubr.f32.mxu0 0.0
  %234 = vmatmul.mubr.f32.gmra.mrb[0].mxu0 %v127
  %v235 = vpop.f32.mrb[0].mxu0
  %v236 = vadd.f32 0.0, %v235
  %v237 = vpop.f32.mrb[0].mxu0
  %238 = vmatprep.mubr.f32.mxu0 0.0
  %239 = vmatmul.mubr.f32.gmra.mrb[0].mxu0 %v128
  %v240 = vpop.f32.mrb[0].mxu0
  %v241 = vadd.f32 0.0, %v240
  %v242 = vpop.f32.mrb[0].mxu0
  %243 = vdwg.mxu0
  %v244 = vmul.f32 %v196, %v221
  %v245 = vmul.f32 %v201, %v226
  %v246 = vmul.f32 %v206, %v231
  %v247 = vmul.f32 %v211, %v236
  %v248 = vmul.f32 %v216, %v241
  %v249 = vadd.f32 %v244, %v245
  %v250 = vadd.f32 %v249, %v246
  %v251 = vadd.f32 %v250, %v247
  %v252 = vadd.f32 %v251, %v248
  %v253 = vrot.slane %v252, 4
  %v254 = vadd.f32 %v252, %v253
  %v255 = vrot.slane %v254, 2
  %v256 = vadd.f32 %v254, %v255
  %v257 = vrot.slane %v256, 1
  %v258 = vadd.f32 %v256, %v257
  %v259 = vsub.f32 %v258, %v11
  %v260 = vmul.f32 %v259, %v259
  %v262 = vrot.slane %v260, 1
  %vm264 = vcmask 1040384
  %v265 = vsel %vm264, %v258, %v262
  %266 = vst [vmem:[%s2] sm:$0x3] %v265
  // Predicated region
  $region10: #{ncf_forward.1} parent=0 // pred_check
    _
  $region11: #{ncf_forward.1} parent=0 // pred_check_branch
    %268 = sbr.rel (0) target = $region13
  $region12: #{ncf_forward.1} parent=0 // pred_region
    _
  $region13: #{ncf_forward.1} parent=0 // pred_fallthru
    _
  // Predicated region
  $region14: #{ncf_forward.1} parent=0 // pred_check
    _
  $region15: #{ncf_forward.1} parent=0 // pred_check_branch
    %270 = sbr.rel (0) target = $region17
  $region16: #{ncf_forward.1} parent=0 // pred_region
    _
  $region17: #{ncf_forward.1} parent=0 // pred_fallthru
    _

</llo_original>
